<compile_context>
chip_gen: v5e
topology: v5e:2x2
jax: 0.10.0
libtpu: 0.0.40
codegen_flags: <defaults>
</compile_context>

<pallas_src>
import math

import jax
import jax.numpy as jnp
from jax import lax
from jax.experimental import pallas as pl
from jax.experimental.pallas import tpu as pltpu


_N_SLOTS = 8                      # in-flight DMA window for the streaming path
_MIN_DMA_BYTES = 128 * 1024       # below this per-copy size, per-DMA overhead wins
_SPLIT_MIN_TOTAL_BYTES = 256 * 1024  # split batch for megacore above this size


def _vmem_capacity_bytes():
    """Generation-aware VMEM capacity; conservative default if query fails."""
    try:
        return int(pltpu.get_tpu_info().vmem_capacity_bytes)
    except Exception:
        return 64 * 1024 * 1024   # v7x physical VMEM (most conservative)


def _sublane(itemsize):
    return {4: 8, 2: 16, 1: 32}.get(itemsize, 8)


def _choose_rows_streaming(max_len, row_bytes, budget, sub):
    """Largest tl that divides max_len, is sublane-aligned, and whose
    double-buffered tile fits in `budget` bytes.  None if no valid choice."""
    if 2 * max_len * row_bytes <= budget:
        return max_len
    for t in range(max_len - 1, 0, -1):
        if max_len % t:
            continue
        if t % sub:               # (8,128)-style block rule when t != max_len
            continue
        if 2 * t * row_bytes <= budget:
            return t
    return None


# ---------------------------------------------------------------------------
# Primary path: table tile in VMEM, batch-many direct VMEM->HBM async copies.
# ---------------------------------------------------------------------------
def _positional_embedding_stream(pe_weight, batch, tl, n_split, vmem_limit):
    max_len, dim = pe_weight.shape
    n_l = max_len // tl                       # tl divides max_len by construction
    bpc = pl.cdiv(batch, n_split)             # batch entries per split

    def kernel(pe_ref, out_hbm, sem):
        # pe_ref : (tl, dim) VMEM tile of the table (auto-pipelined)
        # out_hbm: (batch, max_len, dim) raw HBM ref
        s = pl.program_id(0)
        l = pl.program_id(1)
        row0 = l * tl
        b0 = s * bpc
        count = jnp.minimum(bpc, batch - b0)  # batch entries handled this step

        @pl.loop(0, count)
        def _(i):
            slot = i % _N_SLOTS

            @pl.when(i >= _N_SLOTS)
            def _():
                # Wait for the copy previously issued on this slot (same size).
                pltpu.make_async_copy(
                    pe_ref, out_hbm.at[b0, pl.ds(row0, tl), :], sem.at[slot]
                ).wait()

            pltpu.make_async_copy(
                pe_ref, out_hbm.at[b0 + i, pl.ds(row0, tl), :], sem.at[slot]
            ).start()

        # Drain all still-in-flight copies before this grid step ends.
        @pl.loop(0, jnp.minimum(count, _N_SLOTS))
        def _(i):
            pltpu.make_async_copy(
                pe_ref, out_hbm.at[b0, pl.ds(row0, tl), :], sem.at[i]
            ).wait()

    grid_spec = pltpu.PrefetchScalarGridSpec(
        num_scalar_prefetch=0,
        grid=(n_split, n_l),
        in_specs=[pl.BlockSpec((tl, dim), lambda s, l: (l, 0))],
        out_specs=pl.BlockSpec(memory_space=pl.ANY),
        scratch_shapes=[pltpu.SemaphoreType.DMA((_N_SLOTS,))],
    )
    return pl.pallas_call(
        kernel,
        out_shape=jax.ShapeDtypeStruct((batch, max_len, dim), pe_weight.dtype),
        grid_spec=grid_spec,
        compiler_params=pltpu.CompilerParams(
            dimension_semantics=("parallel", "arbitrary"),
            vmem_limit_bytes=vmem_limit,
        ),
    )(pe_weight)


# ---------------------------------------------------------------------------
# Fallback path: BlockSpec-pipelined output, per-batch-entry store loop.
# ---------------------------------------------------------------------------
def _positional_embedding_blocked(pe_weight, batch, bt, tl, vmem_limit):
    max_len, dim = pe_weight.shape
    n_b = pl.cdiv(batch, bt)
    n_l = pl.cdiv(max_len, tl)

    def kernel(pe_ref, out_ref):
        # out_ref: (bt, tl, dim).  Per-batch store loop: only one (tl, dim)
        # tile of live vregs, no multi-MiB broadcast intermediate.
        def body(i, carry):
            out_ref[i] = pe_ref[...]
            return carry

        lax.fori_loop(0, bt, body, 0, unroll=bt <= 8)

    if n_l == 1:
        # Whole table resident; constant input block index -> fetched once.
        grid = (n_b,)
        in_spec = pl.BlockSpec((tl, dim), lambda b: (0, 0))
        out_spec = pl.BlockSpec((bt, tl, dim), lambda b: (b, 0, 0))
        semantics = ("parallel",)
    else:
        # Batch innermost: table block index constant over the inner sweep,
        # so the tile is NOT re-read from HBM once per batch block.
        grid = (n_l, n_b)
        in_spec = pl.BlockSpec((tl, dim), lambda l, b: (l, 0))
        out_spec = pl.BlockSpec((bt, tl, dim), lambda l, b: (b, l, 0))
        semantics = ("parallel", "arbitrary")

    grid_spec = pltpu.PrefetchScalarGridSpec(
        num_scalar_prefetch=0, grid=grid, in_specs=[in_spec], out_specs=out_spec
    )
    return pl.pallas_call(
        kernel,
        out_shape=jax.ShapeDtypeStruct((batch, max_len, dim), pe_weight.dtype),
        grid_spec=grid_spec,
        compiler_params=pltpu.CompilerParams(
            dimension_semantics=semantics, vmem_limit_bytes=vmem_limit
        ),
    )(pe_weight)


# ---------------------------------------------------------------------------
# Public wrapper.
# ---------------------------------------------------------------------------
def positional_embedding_forward(x, pe_weight, *, force_path=None):
    """pe_weight (max_len, dim) broadcast to (batch, max_len, dim), batch = x.shape[0]."""
    batch = int(x.shape[0])
    max_len, dim = pe_weight.shape
    itemsize = jnp.dtype(pe_weight.dtype).itemsize
    row_bytes = dim * itemsize
    sub = _sublane(itemsize)

    cap = _vmem_capacity_bytes()
    in_budget = cap // 4                       # double-buffered table tile budget
    out_budget = cap // 8                      # (blocked path only)
    vmem_limit = min(cap // 2, 64 * 1024 * 1024)

    # --- Streaming (manual-DMA) path --------------------------------------
    tl_stream = _choose_rows_streaming(max_len, row_bytes, in_budget, sub)
    copy_bytes = (tl_stream or 0) * row_bytes
    use_stream = (tl_stream is not None) and (copy_bytes >= _MIN_DMA_BYTES)
    if force_path == "stream":
        use_stream = tl_stream is not None
    elif force_path == "blocked":
        use_stream = False

    if use_stream:
        total_bytes = batch * max_len * row_bytes
        n_split = 2 if (batch >= 2 and total_bytes >= _SPLIT_MIN_TOTAL_BYTES) else 1
        return _positional_embedding_stream(
            pe_weight, batch, tl_stream, n_split, vmem_limit
        )

    # --- Blocked fallback ---------------------------------------------------
    table_bytes = max_len * row_bytes
    if 2 * table_bytes <= in_budget:
        tl = max_len
    else:
        tl = max(sub, (in_budget // 2) // row_bytes)
        tl = (tl // sub) * sub
        tl = min(tl, max_len)
    bt = max(1, out_budget // (2 * tl * row_bytes))
    bt = min(bt, batch)
    return _positional_embedding_blocked(pe_weight, batch, bt, tl, vmem_limit)


def init_positional_embedding(key, max_len, dim, dtype=jnp.float32):
    """Deterministic xavier_normal_ init of nn.Embedding(max_len, dim).weight."""
    std = math.sqrt(2.0 / (max_len + dim))
    return (jax.random.normal(key, (max_len, dim), dtype=jnp.float32) * std).astype(dtype)


if __name__ == "__main__":
    key = jax.random.PRNGKey(0)
    keys = jax.random.split(key, 6)

    # --- Case 1: tiny table -> blocked (BlockSpec-pipelined) path. ---------
    b1, L1, D1 = 2, 8, 128
    pe1 = init_positional_embedding(keys[0], L1, D1)
    x1 = jax.random.normal(keys[1], (b1, L1, D1), dtype=jnp.float32)
    out1 = jax.block_until_ready(positional_embedding_forward(x1, pe1))
    ref1 = jnp.broadcast_to(pe1[None, :, :], (b1, L1, D1))
    assert out1.shape == ref1.shape and out1.dtype == pe1.dtype
    assert bool(jnp.array_equal(out1, ref1)), "case 1: mismatch vs reference"

    # --- Case 2: DMA-streaming path, single split (batch == 1). ------------
    b2, L2, D2 = 1, 256, 128
    pe2 = init_positional_embedding(keys[2], L2, D2)
    x2 = jax.random.normal(keys[3], (b2, L2, D2), dtype=jnp.float32)
    out2 = jax.block_until_ready(positional_embedding_forward(x2, pe2))
    ref2 = jnp.broadcast_to(pe2[None, :, :], (b2, L2, D2))
    assert bool(jnp.array_equal(out2, ref2)), "case 2: mismatch vs reference"

    # --- Case 3: DMA-streaming path with 2-way megacore batch split. -------
    b3, L3, D3 = 4, 256, 128
    pe3 = init_positional_embedding(keys[4], L3, D3)
    x3 = jax.random.normal(keys[5], (b3, L3, D3), dtype=jnp.float32)
    out3 = jax.block_until_ready(positional_embedding_forward(x3, pe3))
    ref3 = jnp.broadcast_to(pe3[None, :, :], (b3, L3, D3))
    assert bool(jnp.array_equal(out3, ref3)), "case 3: mismatch vs reference"

    print("KERNEL_OK")
</pallas_src>

<mosaic_0001>
module attributes {stable_mosaic.version = 11 : i64} {
  func.func @kernel(%arg0: i32, %arg1: memref<8x128xf32, #tpu.memory_space<vmem>>, %arg2: memref<2x8x128xf32, #tpu.memory_space<vmem>>) attributes {dimension_semantics = [#tpu.dimension_semantics<parallel>], iteration_bounds = array<i64: 1>, scalar_prefetch = 0 : i64, scratch_operands = 0 : i64, tpu.core_type = #tpu.core_type<tc>, window_params = [{pipeline_mode = #tpu.pipeline_mode<synchronous>, transform_indices = @transform_0, window_bounds = array<i64: 8, 128>}, {transform_indices = @transform_1, window_bounds = array<i64: 2, 8, 128>}]} {
    %c0_i32 = arith.constant 0 : i32
    %c0 = arith.constant 0 : index
    %c0_0 = arith.constant 0 : index
    %0 = vector.load %arg1[%c0, %c0_0] : memref<8x128xf32, #tpu.memory_space<vmem>>, vector<8x128xf32>
    %1 = arith.index_cast %c0_i32 : i32 to index
    %c0_1 = arith.constant 0 : index
    %c0_2 = arith.constant 0 : index
    %2 = vector.load %arg2[%1, %c0_1, %c0_2] : memref<2x8x128xf32, #tpu.memory_space<vmem>>, vector<1x8x128xf32>
    %3 = vector.shape_cast %2 : vector<1x8x128xf32> to vector<8x128xf32>
    %4 = vector.shape_cast %0 : vector<8x128xf32> to vector<1x8x128xf32>
    tpu.vector_store %arg2[%1, %c0_1, %c0_2], %4 {strides = array<i32>} : memref<2x8x128xf32, #tpu.memory_space<vmem>>, vector<1x8x128xf32>,
    %c1_i32 = arith.constant 1 : i32
    %c0_3 = arith.constant 0 : index
    %c0_4 = arith.constant 0 : index
    %5 = vector.load %arg1[%c0_3, %c0_4] : memref<8x128xf32, #tpu.memory_space<vmem>>, vector<8x128xf32>
    %6 = arith.index_cast %c1_i32 : i32 to index
    %c0_5 = arith.constant 0 : index
    %c0_6 = arith.constant 0 : index
    %7 = vector.load %arg2[%6, %c0_5, %c0_6] : memref<2x8x128xf32, #tpu.memory_space<vmem>>, vector<1x8x128xf32>
    %8 = vector.shape_cast %7 : vector<1x8x128xf32> to vector<8x128xf32>
    %9 = vector.shape_cast %5 : vector<8x128xf32> to vector<1x8x128xf32>
    tpu.vector_store %arg2[%6, %c0_5, %c0_6], %9 {strides = array<i32>} : memref<2x8x128xf32, #tpu.memory_space<vmem>>, vector<1x8x128xf32>,
    %c2_i32 = arith.constant 2 : i32
    return
  }
  func.func @transform_0(%arg0: i32) -> (i32, i32) {
    %c0_i32 = arith.constant 0 : i32
    %c0_i32_0 = arith.constant 0 : i32
    %c0_i32_1 = arith.constant 0 : i32
    return %c0_i32, %c0_i32_0 : i32, i32
  }
  func.func @transform_1(%arg0: i32) -> (i32, i32, i32) {
    %c0_i32 = arith.constant 0 : i32
    %c0_i32_0 = arith.constant 0 : i32
    %c0_i32_1 = arith.constant 0 : i32
    return %arg0, %c0_i32, %c0_i32_0 : i32, i32, i32
  }
}

</mosaic_0001>

<llo_original>
// kernel: tpu_custom_call.1
$region0: #{tpu_custom_call.1}
  #allocation0 [shape = 'u32[]', space=smem, size = 0x4, offset = 0x4, fixed_abs, tag = 'smem constant byte address 0x4 - core index']
  #allocation1 [shape = 'u32[72,128]{1,0:T(1,128)}', space=vmem, size = 0x9000, scoped, tag = 'internal scratch']
  %s0 = inlined_call_operand.hbm [shape: f32[8,128], index: 0, kind: input, shape index: {}]
  %s1 = inlined_call_operand.hbm [shape: f32[2,8,128], index: 1, kind: output, shape index: {}]
  %s2 = sld [smem:[#allocation0]]
  $region18: #{tpu_custom_call.1} parent=0
    _
  %s4 = ssub.s32 1, %s2
  %s5 = scalar_select 0, %s4, %s2
  $region1: #{tpu_custom_call.1} parent=0
    #allocation2 [shape = 'u8[4096]{0}', space=vmem, size = 0x1000, scoped, tag = 'input window, operand 0, single buffered']
    #allocation3 [shape = 's32[1]{0}', space=sflag, size = 0x4, scoped, tag = 'scoped memory for tpu_custom_call.1']
    #allocation4 [shape = 's32[1]{0}', space=sflag, size = 0x4, scoped, tag = 'scoped memory for tpu_custom_call.1']
    #allocation5 [shape = 'u8[8192]{0}', space=vmem, size = 0x2000, scoped, tag = 'output window, operand 0, single buffered']
    %6 = vsyncpa [#allocation3], 0
    %7 = vsyncpa [#allocation4], 0
    // Predicated region
    $region2: #{tpu_custom_call.1} parent=1 // pred_check
      _
    $region3: #{tpu_custom_call.1} parent=1 // pred_check_branch
      %9 = sbr.rel (0) target = $region5
    $region4: #{tpu_custom_call.1} parent=1 // pred_region
      %11 = vsyncadd [#allocation3], 0
      %s13 = sshll.u32 %s0, 4
      %s14 = int_to_ptr.hbm [resolvable:$true] %s13
      %s15 = sshll.u32 [#allocation2], 4
      %s16 = int_to_ptr.vmem [resolvable:$true] %s15
      %18 = dma.hbm_to_vmem [thread:$0]  %s14, 128, %s16, [#allocation3]
    $region5: #{tpu_custom_call.1} parent=1 // pred_fallthru
      _
    // Predicated region
    $region6: #{tpu_custom_call.1} parent=1 // pred_check
      _
    $region7: #{tpu_custom_call.1} parent=1 // pred_check_branch
      %20 = sbr.rel (0) target = $region9
    $region8: #{tpu_custom_call.1} parent=1 // pred_region
      %22 = dma.done [#allocation3], 128
    $region9: #{tpu_custom_call.1} parent=1 // pred_fallthru
      _
    %v23 = vld [vmem:[#allocation2] sm:$0xff]
    %24 = vst [vmem:[#allocation5] sm:$0xff] %v23
    %v25 = vld [vmem:[#allocation2] sm:$0xff]
    %s26 = scalar_lea.vmem [#allocation5], 8
    %27 = vst [vmem:[%s26] sm:$0xff] %v25
    // Predicated region
    $region10: #{tpu_custom_call.1} parent=1 // pred_check
      _
    $region11: #{tpu_custom_call.1} parent=1 // pred_check_branch
      %29 = sbr.rel (0) target = $region13
    $region12: #{tpu_custom_call.1} parent=1 // pred_region
      %31 = vsyncadd [#allocation4], 0
      %s32 = sshll.u32 [#allocation5], 4
      %s33 = int_to_ptr.vmem [resolvable:$true] %s32
      %s34 = sshll.u32 %s1, 4
      %s35 = int_to_ptr.hbm [resolvable:$true] %s34
      %40 = dma.vmem_to_hbm [thread:$0]  %s33, 256, %s35, [#allocation4], 128, 128, 8
    $region13: #{tpu_custom_call.1} parent=1 // pred_fallthru
      _
    // Predicated region
    $region14: #{tpu_custom_call.1} parent=1 // pred_check
      _
    $region15: #{tpu_custom_call.1} parent=1 // pred_check_branch
      %42 = sbr.rel (0) target = $region17
    $region16: #{tpu_custom_call.1} parent=1 // pred_region
      %44 = dma.done [#allocation4], 256
    $region17: #{tpu_custom_call.1} parent=1 // pred_fallthru
      _
    %45 = vsyncpa [#allocation3], 1
    %46 = vsyncpa [#allocation4], 1

</llo_original>
